<compile_context>
chip_gen: v6e
topology: v6e:2x2x1
jax: 0.10.0
libtpu: 0.0.40
codegen_flags: <defaults>
</compile_context>

<pallas_src>
import jax
import jax.numpy as jnp
from jax.experimental import pallas as pl
from jax.experimental.pallas import tpu as pltpu


def _round_up(x, m):
    return ((x + m - 1) // m) * m


def _mapping_net_kernel(x_ref, w1_ref, b1_ref, w2_ref, b2_ref, o_ref):
    # In-kernel cast of the x tile (data already in VMEM; hidden under DMA/MXU).
    x = x_ref[...].astype(w1_ref.dtype)
    # fc1: (tb, in) @ (in, hidden_pad) -> f32 accumulation on the MXU.
    h = jnp.dot(x, w1_ref[...], preferred_element_type=jnp.float32)
    # Bias + ReLU in f32 (v5e-safe epilogue).
    h = jnp.maximum(h + b1_ref[...], 0.0)
    # fc2: (tb, hidden_pad) @ (hidden_pad, out) -> f32 accumulation.
    y = jnp.dot(h.astype(w2_ref.dtype), w2_ref[...],
                preferred_element_type=jnp.float32)
    o_ref[...] = (y + b2_ref[...]).astype(o_ref.dtype)


def prepare_mapping_net_params(w1, b1, w2, b2, compute_dtype=None):
    """One-time repack of PyTorch-convention params into kernel layout.

    w1: (hidden, in), b1: (hidden,), w2: (out, hidden), b2: (out,)
    Weights are transposed to (in, hidden_pad) / (hidden_pad, out) with the
    hidden dim zero-padded to a 128 multiple (lane-dense).  The output dim is
    NOT padded (narrow output block, masked stores, 16x less writeback).
    Biases are stored as f32 rows.  Do this once at init, not per forward call.
    For v6e/v7x pass compute_dtype=jnp.bfloat16 for full-rate MXU + half the
    weight DMA.
    """
    hidden_dim, input_dim = w1.shape
    output_dim = w2.shape[0]
    hp = _round_up(hidden_dim, 128)
    dt = jnp.dtype(compute_dtype) if compute_dtype is not None else jnp.dtype(w1.dtype)

    w1_t = jnp.zeros((input_dim, hp), dt).at[:, :hidden_dim].set(w1.T.astype(dt))
    b1_p = jnp.zeros((1, hp), jnp.float32).at[:, :hidden_dim].set(b1.astype(jnp.float32))
    w2_t = jnp.zeros((hp, output_dim), dt).at[:hidden_dim, :].set(w2.T.astype(dt))
    b2_p = b2.astype(jnp.float32).reshape(1, output_dim)
    return {"w1": w1_t, "b1": b1_p, "w2": w2_t, "b2": b2_p,
            "output_dim": output_dim, "compute_dtype": dt}


def _choose_batch_tile(B, block_b, sub):
    """Large batch tile (overhead/HBM-bound kernel), but keep >=4 grid steps
    when B is large so v7x megacore gets >=2 pipelined steps per TensorCore."""
    if B <= sub:
        return B                       # one block; block dim == full array dim is legal
    tb = min(block_b, _round_up(B, sub))
    min_steps, min_tile = 4, 128
    if B >= min_steps * min_tile:
        tb = min(tb, max(min_tile, (B // min_steps) // sub * sub))
    if tb >= B:
        tb = B                         # single block covering the whole (small) batch
    return tb


_SINGLE_BUFFER_WEIGHTS_OK = True  # flipped if this Pallas build rejects pl.Buffered(1)


def mapping_net_forward(x, params, block_b=1024, single_buffer_weights=True):
    """x: (B, input_dim); params from prepare_mapping_net_params.

    Returns (B, output_dim) in x.dtype.  Single pallas_call: no wrapper-side
    pad / dtype cast / output slice.
    """
    global _SINGLE_BUFFER_WEIGHTS_OK
    B, input_dim = x.shape
    w1, b1, w2, b2 = params["w1"], params["b1"], params["w2"], params["b2"]
    hp = w1.shape[1]
    output_dim = w2.shape[1]
    cdt = jnp.dtype(params["compute_dtype"])

    # bf16 tiles pack 16 sublanes per vreg -> round the batch tile to 16.
    sub = 16 if (cdt.itemsize < 4 or jnp.dtype(x.dtype).itemsize < 4) else 8
    tb = _choose_batch_tile(B, block_b, sub)
    grid = (pl.cdiv(B, tb),)

    # VMEM budget: double-buffered x/out tiles + (conservatively double-buffered)
    # weights.  Only set an explicit limit for very large tiles; keep headroom
    # under v7x's 64 MiB physical VMEM (scoped default is 32 MiB v6e/v7x, 16 MiB v5e).
    x_bytes = jnp.dtype(x.dtype).itemsize
    weight_bytes = (w1.size + w2.size) * cdt.itemsize + (b1.size + b2.size) * 4
    est = 2 * tb * (input_dim + output_dim) * x_bytes + 2 * weight_bytes + (2 << 20)
    vmem_limit = min(int(est * 1.5), 60 * 1024 * 1024) if est > (16 << 20) else None

    def build(single_buffer):
        # Constant index_maps: the weight/bias blocks never change across the
        # grid, so they are not re-DMA'd per step; Buffered(1) additionally
        # drops the second VMEM copy.
        w_kwargs = {"pipeline_mode": pl.Buffered(1)} if single_buffer else {}
        return pl.pallas_call(
            _mapping_net_kernel,
            out_shape=jax.ShapeDtypeStruct((B, output_dim), x.dtype),
            grid=grid,
            in_specs=[
                pl.BlockSpec((tb, input_dim), lambda i: (i, 0)),
                pl.BlockSpec((input_dim, hp), lambda i: (0, 0), **w_kwargs),
                pl.BlockSpec((1, hp), lambda i: (0, 0), **w_kwargs),
                pl.BlockSpec((hp, output_dim), lambda i: (0, 0), **w_kwargs),
                pl.BlockSpec((1, output_dim), lambda i: (0, 0), **w_kwargs),
            ],
            # Narrow output block: last dim equals the full array dim (legal);
            # stores are lane-masked but writeback bytes drop 16x vs. a
            # 128-padded output, and the post-kernel slice pass disappears.
            out_specs=pl.BlockSpec((tb, output_dim), lambda i: (i, 0)),
            compiler_params=pltpu.CompilerParams(
                dimension_semantics=("parallel",),
                vmem_limit_bytes=vmem_limit),
        )

    if single_buffer_weights and _SINGLE_BUFFER_WEIGHTS_OK:
        try:
            return build(True)(x, w1, b1, w2, b2)
        except Exception:
            # This Pallas build does not accept pl.Buffered(1) here; fall back
            # to default double buffering (a few KiB of extra VMEM only).
            _SINGLE_BUFFER_WEIGHTS_OK = False
    return build(False)(x, w1, b1, w2, b2)


def init_mapping_net_params(key, input_dim, hidden_dim, output_dim, dtype=jnp.float32):
    """PyTorch nn.Linear default init: U(-1/sqrt(fan_in), 1/sqrt(fan_in))."""
    k1, k2, k3, k4 = jax.random.split(key, 4)
    bound1 = 1.0 / (input_dim ** 0.5)
    bound2 = 1.0 / (hidden_dim ** 0.5)
    w1 = jax.random.uniform(k1, (hidden_dim, input_dim), dtype, -bound1, bound1)
    b1 = jax.random.uniform(k2, (hidden_dim,), dtype, -bound1, bound1)
    w2 = jax.random.uniform(k3, (output_dim, hidden_dim), dtype, -bound2, bound2)
    b2 = jax.random.uniform(k4, (output_dim,), dtype, -bound2, bound2)
    return w1, b1, w2, b2


if __name__ == "__main__":
    key = jax.random.PRNGKey(0)
    kx, kp = jax.random.split(key)

    # Module-consistent feature dims.
    input_dim, hidden_dim, output_dim = 16, 32, 8
    w1, b1, w2, b2 = init_mapping_net_params(kp, input_dim, hidden_dim, output_dim)

    def torch_ref(x):
        # PyTorch semantics: fc2(relu(fc1(x))).
        return jnp.maximum(x @ w1.T + b1, 0.0) @ w2.T + b2

    # ---- f32 path (bit-for-bit-ish parity with the PyTorch reference) ----
    params_f32 = prepare_mapping_net_params(w1, b1, w2, b2)
    # B=4: tiny single-block case; B=520: multi-step grid with a ragged
    # (masked) last batch tile -- no wrapper-side padding or slicing.
    for B in (4, 520):
        x = jax.random.normal(jax.random.fold_in(kx, B), (B, input_dim), jnp.float32)
        out = jax.block_until_ready(mapping_net_forward(x, params_f32))
        assert out.shape == (B, output_dim)
        assert jnp.allclose(out, torch_ref(x), atol=1e-4, rtol=1e-4)

    # ---- bf16 compute path (v6e/v7x MXU throughput; f32 epilogue kept) ----
    params_bf16 = prepare_mapping_net_params(w1, b1, w2, b2,
                                             compute_dtype=jnp.bfloat16)
    B = 512
    x = jax.random.normal(jax.random.fold_in(kx, 999), (B, input_dim), jnp.float32)
    out = jax.block_until_ready(mapping_net_forward(x, params_bf16))
    assert out.shape == (B, output_dim)
    assert jnp.allclose(out, torch_ref(x), atol=1e-1, rtol=5e-2)

    print("KERNEL_OK")
</pallas_src>

<mosaic_0001>
module attributes {stable_mosaic.version = 11 : i64} {
  func.func @_mapping_net_kernel(%arg0: i32, %arg1: memref<4x16xf32, #tpu.memory_space<vmem>>, %arg2: memref<16x128xf32, #tpu.memory_space<vmem>>, %arg3: memref<1x128xf32, #tpu.memory_space<vmem>>, %arg4: memref<128x8xf32, #tpu.memory_space<vmem>>, %arg5: memref<1x8xf32, #tpu.memory_space<vmem>>, %arg6: memref<4x8xf32, #tpu.memory_space<vmem>>) attributes {dimension_semantics = [#tpu.dimension_semantics<parallel>], iteration_bounds = array<i64: 1>, scalar_prefetch = 0 : i64, scratch_operands = 0 : i64, tpu.core_type = #tpu.core_type<tc>, window_params = [{transform_indices = @transform_0, window_bounds = array<i64: 4, 16>}, {pipeline_mode = #tpu.pipeline_mode<synchronous>, transform_indices = @transform_1, window_bounds = array<i64: 16, 128>}, {pipeline_mode = #tpu.pipeline_mode<synchronous>, transform_indices = @transform_2, window_bounds = array<i64: 1, 128>}, {pipeline_mode = #tpu.pipeline_mode<synchronous>, transform_indices = @transform_3, window_bounds = array<i64: 128, 8>}, {pipeline_mode = #tpu.pipeline_mode<synchronous>, transform_indices = @transform_4, window_bounds = array<i64: 1, 8>}, {transform_indices = @transform_5, window_bounds = array<i64: 4, 8>}]} {
    %c0 = arith.constant 0 : index
    %c0_0 = arith.constant 0 : index
    %0 = vector.load %arg1[%c0, %c0_0] : memref<4x16xf32, #tpu.memory_space<vmem>>, vector<4x16xf32>
    %c0_1 = arith.constant 0 : index
    %c0_2 = arith.constant 0 : index
    %1 = vector.load %arg2[%c0_1, %c0_2] : memref<16x128xf32, #tpu.memory_space<vmem>>, vector<16x128xf32>
    %cst = arith.constant dense<0.000000e+00> : vector<4x128xf32>
    %2 = tpu.matmul %0, %1, %cst {dimension_numbers = #tpu.dot_dimension_numbers<[1], [0], [0], [1], [0, 0, 1, 1], [], []>} : vector<4x16xf32>, vector<16x128xf32>, vector<4x128xf32> -> vector<4x128xf32>
    %c0_3 = arith.constant 0 : index
    %c0_4 = arith.constant 0 : index
    %3 = vector.load %arg3[%c0_3, %c0_4] : memref<1x128xf32, #tpu.memory_space<vmem>>, vector<1x128xf32>
    %4 = vector.broadcast %3 : vector<1x128xf32> to vector<4x128xf32>
    %5 = arith.addf %2, %4 : vector<4x128xf32>
    %cst_5 = arith.constant 0.000000e+00 : f32
    %6 = vector.broadcast %cst_5 : f32 to vector<4x128xf32>
    %7 = arith.maximumf %5, %6 : vector<4x128xf32>
    %c0_6 = arith.constant 0 : index
    %c0_7 = arith.constant 0 : index
    %8 = vector.load %arg4[%c0_6, %c0_7] : memref<128x8xf32, #tpu.memory_space<vmem>>, vector<128x8xf32>
    %cst_8 = arith.constant dense<0.000000e+00> : vector<4x8xf32>
    %9 = tpu.matmul %7, %8, %cst_8 {dimension_numbers = #tpu.dot_dimension_numbers<[1], [0], [0], [1], [0, 0, 1, 1], [], []>} : vector<4x128xf32>, vector<128x8xf32>, vector<4x8xf32> -> vector<4x8xf32>
    %c0_9 = arith.constant 0 : index
    %c0_10 = arith.constant 0 : index
    %10 = vector.load %arg5[%c0_9, %c0_10] : memref<1x8xf32, #tpu.memory_space<vmem>>, vector<1x8xf32>
    %11 = vector.broadcast %10 : vector<1x8xf32> to vector<4x8xf32>
    %12 = arith.addf %9, %11 : vector<4x8xf32>
    %c0_11 = arith.constant 0 : index
    %c0_12 = arith.constant 0 : index
    %13 = vector.load %arg6[%c0_11, %c0_12] : memref<4x8xf32, #tpu.memory_space<vmem>>, vector<4x8xf32>
    tpu.vector_store %arg6[%c0_11, %c0_12], %12 {strides = array<i32>} : memref<4x8xf32, #tpu.memory_space<vmem>>, vector<4x8xf32>,
    return
  }
  func.func @transform_0(%arg0: i32) -> (i32, i32) {
    %c0_i32 = arith.constant 0 : i32
    %c0_i32_0 = arith.constant 0 : i32
    return %arg0, %c0_i32 : i32, i32
  }
  func.func @transform_1(%arg0: i32) -> (i32, i32) {
    %c0_i32 = arith.constant 0 : i32
    %c0_i32_0 = arith.constant 0 : i32
    %c0_i32_1 = arith.constant 0 : i32
    return %c0_i32, %c0_i32_0 : i32, i32
  }
  func.func @transform_2(%arg0: i32) -> (i32, i32) {
    %c0_i32 = arith.constant 0 : i32
    %c0_i32_0 = arith.constant 0 : i32
    %c0_i32_1 = arith.constant 0 : i32
    return %c0_i32, %c0_i32_0 : i32, i32
  }
  func.func @transform_3(%arg0: i32) -> (i32, i32) {
    %c0_i32 = arith.constant 0 : i32
    %c0_i32_0 = arith.constant 0 : i32
    %c0_i32_1 = arith.constant 0 : i32
    return %c0_i32, %c0_i32_0 : i32, i32
  }
  func.func @transform_4(%arg0: i32) -> (i32, i32) {
    %c0_i32 = arith.constant 0 : i32
    %c0_i32_0 = arith.constant 0 : i32
    %c0_i32_1 = arith.constant 0 : i32
    return %c0_i32, %c0_i32_0 : i32, i32
  }
  func.func @transform_5(%arg0: i32) -> (i32, i32) {
    %c0_i32 = arith.constant 0 : i32
    %c0_i32_0 = arith.constant 0 : i32
    return %arg0, %c0_i32 : i32, i32
  }
}

module attributes {stable_mosaic.version = 11 : i64} {
  func.func @_mapping_net_kernel(%arg0: i32, %arg1: memref<4x16xf32, #tpu.memory_space<vmem>>, %arg2: memref<16x128xf32, #tpu.memory_space<vmem>>, %arg3: memref<1x128xf32, #tpu.memory_space<vmem>>, %arg4: memref<128x8xf32, #tpu.memory_space<vmem>>, %arg5: memref<1x8xf32, #tpu.memory_space<vmem>>, %arg6: memref<4x8xf32, #tpu.memory_space<vmem>>) attributes {dimension_semantics = [#tpu.dimension_semantics<parallel>], iteration_bounds = array<i64: 1>, scalar_prefetch = 0 : i64, scratch_operands = 0 : i64, tpu.core_type = #tpu.core_type<tc>, window_params = [{transform_indices = @transform_0, window_bounds = array<i64: 4, 16>}, {pipeline_mode = #tpu.pipeline_mode<synchronous>, transform_indices = @transform_1, window_bounds = array<i64: 16, 128>}, {pipeline_mode = #tpu.pipeline_mode<synchronous>, transform_indices = @transform_2, window_bounds = array<i64: 1, 128>}, {pipeline_mode = #tpu.pipeline_mode<synchronous>, transform_indices = @transform_3, window_bounds = array<i64: 128, 8>}, {pipeline_mode = #tpu.pipeline_mode<synchronous>, transform_indices = @transform_4, window_bounds = array<i64: 1, 8>}, {transform_indices = @transform_5, window_bounds = array<i64: 4, 8>}]} {
    %c0 = arith.constant 0 : index
    %c0_0 = arith.constant 0 : index
    %0 = vector.load %arg1[%c0, %c0_0] : memref<4x16xf32, #tpu.memory_space<vmem>>, vector<4x16xf32>
    %c0_1 = arith.constant 0 : index
    %c0_2 = arith.constant 0 : index
    %1 = vector.load %arg2[%c0_1, %c0_2] : memref<16x128xf32, #tpu.memory_space<vmem>>, vector<16x128xf32>
    %cst = arith.constant dense<0.000000e+00> : vector<4x128xf32>
    %2 = tpu.matmul %0, %1, %cst {dimension_numbers = #tpu.dot_dimension_numbers<[1], [0], [0], [1], [0, 0, 1, 1], [], []>} : vector<4x16xf32>, vector<16x128xf32>, vector<4x128xf32> -> vector<4x128xf32>
    %c0_3 = arith.constant 0 : index
    %c0_4 = arith.constant 0 : index
    %3 = vector.load %arg3[%c0_3, %c0_4] : memref<1x128xf32, #tpu.memory_space<vmem>>, vector<1x128xf32>
    %4 = vector.broadcast %3 : vector<1x128xf32> to vector<4x128xf32>
    %5 = arith.addf %2, %4 : vector<4x128xf32>
    %cst_5 = arith.constant 0.000000e+00 : f32
    %6 = vector.broadcast %cst_5 : f32 to vector<4x128xf32>
    %7 = arith.maximumf %5, %6 : vector<4x128xf32>
    %c0_6 = arith.constant 0 : index
    %c0_7 = arith.constant 0 : index
    %8 = vector.load %arg4[%c0_6, %c0_7] : memref<128x8xf32, #tpu.memory_space<vmem>>, vector<128x8xf32>
    %cst_8 = arith.constant dense<0.000000e+00> : vector<4x8xf32>
    %9 = tpu.matmul %7, %8, %cst_8 {dimension_numbers = #tpu.dot_dimension_numbers<[1], [0], [0], [1], [0, 0, 1, 1], [], []>} : vector<4x128xf32>, vector<128x8xf32>, vector<4x8xf32> -> vector<4x8xf32>
    %c0_9 = arith.constant 0 : index
    %c0_10 = arith.constant 0 : index
    %10 = vector.load %arg5[%c0_9, %c0_10] : memref<1x8xf32, #tpu.memory_space<vmem>>, vector<1x8xf32>
    %11 = vector.broadcast %10 : vector<1x8xf32> to vector<4x8xf32>
    %12 = arith.addf %9, %11 : vector<4x8xf32>
    %c0_11 = arith.constant 0 : index
    %c0_12 = arith.constant 0 : index
    %13 = vector.load %arg6[%c0_11, %c0_12] : memref<4x8xf32, #tpu.memory_space<vmem>>, vector<4x8xf32>
    tpu.vector_store %arg6[%c0_11, %c0_12], %12 {strides = array<i32>} : memref<4x8xf32, #tpu.memory_space<vmem>>, vector<4x8xf32>,
    return
  }
  func.func @transform_0(%arg0: i32) -> (i32, i32) {
    %c0_i32 = arith.constant 0 : i32
    %c0_i32_0 = arith.constant 0 : i32
    return %arg0, %c0_i32 : i32, i32
  }
  func.func @transform_1(%arg0: i32) -> (i32, i32) {
    %c0_i32 = arith.constant 0 : i32
    %c0_i32_0 = arith.constant 0 : i32
    %c0_i32_1 = arith.constant 0 : i32
    return %c0_i32, %c0_i32_0 : i32, i32
  }
  func.func @transform_2(%arg0: i32) -> (i32, i32) {
    %c0_i32 = arith.constant 0 : i32
    %c0_i32_0 = arith.constant 0 : i32
    %c0_i32_1 = arith.constant 0 : i32
    return %c0_i32, %c0_i32_0 : i32, i32
  }
  func.func @transform_3(%arg0: i32) -> (i32, i32) {
    %c0_i32 = arith.constant 0 : i32
    %c0_i32_0 = arith.constant 0 : i32
    %c0_i32_1 = arith.constant 0 : i32
    return %c0_i32, %c0_i32_0 : i32, i32
  }
  func.func @transform_4(%arg0: i32) -> (i32, i32) {
    %c0_i32 = arith.constant 0 : i32
    %c0_i32_0 = arith.constant 0 : i32
    %c0_i32_1 = arith.constant 0 : i32
    return %c0_i32, %c0_i32_0 : i32, i32
  }
  func.func @transform_5(%arg0: i32) -> (i32, i32) {
    %c0_i32 = arith.constant 0 : i32
    %c0_i32_0 = arith.constant 0 : i32
    return %arg0, %c0_i32 : i32, i32
  }
}

</mosaic_0001>

<llo_original>
// kernel: tpu_custom_call.1
$region0: #{tpu_custom_call.1}
  #allocation0 [shape = 'u32[]', space=smem, size = 0x4, offset = 0x4, fixed_abs, tag = 'smem constant byte address 0x4 - core index']
  #allocation1 [shape = 'u32[144,128]{1,0:T(1,128)}', space=vmem, size = 0x12000, scoped, tag = 'internal scratch']
  %s0 = inlined_call_operand.vmem [shape: f32[4,16], index: 0, kind: input, shape index: {}]
  %s1 = inlined_call_operand.vmem [shape: f32[16,128], index: 1, kind: input, shape index: {}]
  %s2 = inlined_call_operand.vmem [shape: f32[1,128], index: 2, kind: input, shape index: {}]
  %s3 = inlined_call_operand.vmem [shape: f32[128,8], index: 3, kind: input, shape index: {}]
  %s4 = inlined_call_operand.vmem [shape: f32[1,8], index: 4, kind: input, shape index: {}]
  %s5 = inlined_call_operand.hbm [shape: f32[4,8], index: 5, kind: output, shape index: {}]
  %s6 = sld [smem:[#allocation0]]
  $region30: #{tpu_custom_call.1} parent=0
    _
  %s8 = ssub.s32 1, %s6
  %s9 = scalar_select 0, %s8, %s6
  $region1: #{tpu_custom_call.1} parent=0
    #allocation2 [shape = 'u8[2048]{0}', space=vmem, size = 0x800, scoped, tag = 'output window, operand 0, single buffered']
    #allocation3 [shape = 's32[1]{0}', space=sflag, size = 0x4, scoped, tag = 'scoped memory for tpu_custom_call.1']
    %10 = vsyncpa [#allocation3], 0
    // Predicated region
    $region2: #{tpu_custom_call.1} parent=1 // pred_check
      _
    $region3: #{tpu_custom_call.1} parent=1 // pred_check_branch
      %12 = sbr.rel (0) target = $region5
    $region4: #{tpu_custom_call.1} parent=1 // pred_region
      _
    $region5: #{tpu_custom_call.1} parent=1 // pred_fallthru
      _
    // Predicated region
    $region6: #{tpu_custom_call.1} parent=1 // pred_check
      _
    $region7: #{tpu_custom_call.1} parent=1 // pred_check_branch
      %14 = sbr.rel (0) target = $region9
    $region8: #{tpu_custom_call.1} parent=1 // pred_region
      _
    $region9: #{tpu_custom_call.1} parent=1 // pred_fallthru
      _
    // Predicated region
    $region10: #{tpu_custom_call.1} parent=1 // pred_check
      _
    $region11: #{tpu_custom_call.1} parent=1 // pred_check_branch
      %16 = sbr.rel (0) target = $region13
    $region12: #{tpu_custom_call.1} parent=1 // pred_region
      _
    $region13: #{tpu_custom_call.1} parent=1 // pred_fallthru
      _
    // Predicated region
    $region14: #{tpu_custom_call.1} parent=1 // pred_check
      _
    $region15: #{tpu_custom_call.1} parent=1 // pred_check_branch
      %18 = sbr.rel (0) target = $region17
    $region16: #{tpu_custom_call.1} parent=1 // pred_region
      _
    $region17: #{tpu_custom_call.1} parent=1 // pred_fallthru
      _
    // Predicated region
    $region18: #{tpu_custom_call.1} parent=1 // pred_check
      _
    $region19: #{tpu_custom_call.1} parent=1 // pred_check_branch
      %20 = sbr.rel (0) target = $region21
    $region20: #{tpu_custom_call.1} parent=1 // pred_region
      _
    $region21: #{tpu_custom_call.1} parent=1 // pred_fallthru
      _
    %v21 = vld [vmem:[%s0] sm:$0xf]
    %v22 = vld [vmem:[%s1] sm:$0xff]
    %v23 = vld [vmem:[%s1 + $0x8] sm:$0xff]
    %v24 = vld [vmem:[%s2] sm:$0x1]
    %v26 = vlaneseq
    %v27 = vshrl.u32 %v26, 7
    %v28 = vsub.s32 0, %v27
    %v29 = vrot.slane %v24, %v28
    %vm31 = vcmask 130048
    %v33 = vsel %vm31, %v21, 0
    %35 = vmatprep.subr.mxu0 0.0
    %36 = vmatpush1.msra.mxu0 0.0
    %37 = vmatprep.subr.mxu0 0.0
    %38 = vmatpush1.msra.mxu0 0.0
    %39 = vmatprep.subr.mxu0 0.0
    %40 = vmatpush1.msra.mxu0 0.0
    %41 = vmatprep.subr.mxu0 0.0
    %42 = vmatpush1.msra.mxu0 0.0
    %43 = vmatprep.subr.mxu0 0.0
    %44 = vmatpush1.msra.mxu0 0.0
    %45 = vmatprep.subr.mxu0 0.0
    %46 = vmatpush1.msra.mxu0 0.0
    %47 = vmatprep.subr.mxu0 0.0
    %48 = vmatpush1.msra.mxu0 0.0
    %49 = vmatprep.subr.mxu0 0.0
    %50 = vmatpush1.msra.mxu0 0.0
    %51 = vmatprep.subr.mxu0 0.0
    %52 = vmatpush1.msra.mxu0 0.0
    %53 = vmatprep.subr.mxu0 0.0
    %54 = vmatpush1.msra.mxu0 0.0
    %55 = vmatprep.subr.mxu0 0.0
    %56 = vmatpush1.msra.mxu0 0.0
    %57 = vmatprep.subr.mxu0 0.0
    %58 = vmatpush1.msra.mxu0 0.0
    %59 = vmatprep.subr.mxu0 0.0
    %60 = vmatpush1.msra.mxu0 0.0
    %61 = vmatprep.subr.mxu0 0.0
    %62 = vmatpush1.msra.mxu0 0.0
    %63 = vmatprep.subr.mxu0 0.0
    %64 = vmatpush1.msra.mxu0 %v23
    %65 = vmatprep.subr.mxu0 0.0
    %66 = vmatpush1.msra.mxu0 %v22
    %67 = vmatprep.subr.mxu0 0.0
    %68 = vmatpush2.msra.mxu0 0.0
    %69 = vmatprep.subr.mxu0 0.0
    %70 = vmatpush2.msra.mxu0 0.0
    %71 = vmatprep.subr.mxu0 0.0
    %72 = vmatpush2.msra.mxu0 0.0
    %73 = vmatprep.subr.mxu0 0.0
    %74 = vmatpush2.msra.mxu0 0.0
    %75 = vmatprep.subr.mxu0 0.0
    %76 = vmatpush2.msra.mxu0 0.0
    %77 = vmatprep.subr.mxu0 0.0
    %78 = vmatpush2.msra.mxu0 0.0
    %79 = vmatprep.subr.mxu0 0.0
    %80 = vmatpush2.msra.mxu0 0.0
    %81 = vmatprep.subr.mxu0 0.0
    %82 = vmatpush2.msra.mxu0 0.0
    %83 = vmatprep.subr.mxu0 0.0
    %84 = vmatpush2.msra.mxu0 0.0
    %85 = vmatprep.subr.mxu0 0.0
    %86 = vmatpush2.msra.mxu0 0.0
    %87 = vmatprep.subr.mxu0 0.0
    %88 = vmatpush2.msra.mxu0 0.0
    %89 = vmatprep.subr.mxu0 0.0
    %90 = vmatpush2.msra.mxu0 0.0
    %91 = vmatprep.subr.mxu0 0.0
    %92 = vmatpush2.msra.mxu0 0.0
    %93 = vmatprep.subr.mxu0 0.0
    %94 = vmatpush2.msra.mxu0 0.0
    %95 = vmatprep.subr.mxu0 0.0
    %96 = vmatpush2.msra.mxu0 0.0
    %97 = vmatprep.subr.mxu0 0.0
    %98 = vmatpush2.msra.mxu0 0.0
    %99 = vmatprep.mubr.f32.mxu0 0.0
    %100 = vmatmul.mubr.f32.gmra.mxu0 %v33
    %v101 = vpop.f32.mrf.mxu0
    %v102 = vadd.f32 %v29, %v101
    %v103 = vpop.f32.mrf.mxu0
    %104 = vdwg.mxu0
    %v105 = vmax.f32 %v102, 0.0
    %v106 = vld [vmem:[%s3] sm:$0xff]
    %v107 = vld [vmem:[%s3 + $0x8] sm:$0xff]
    %v108 = vld [vmem:[%s3 + $0x10] sm:$0xff]
    %v109 = vld [vmem:[%s3 + $0x18] sm:$0xff]
    %v110 = vld [vmem:[%s3 + $0x20] sm:$0xff]
    %v111 = vld [vmem:[%s3 + $0x28] sm:$0xff]
    %v112 = vld [vmem:[%s3 + $0x30] sm:$0xff]
    %v113 = vld [vmem:[%s3 + $0x38] sm:$0xff]
    %v114 = vld [vmem:[%s3 + $0x40] sm:$0xff]
    %v115 = vld [vmem:[%s3 + $0x48] sm:$0xff]
    %v116 = vld [vmem:[%s3 + $0x50] sm:$0xff]
    %v117 = vld [vmem:[%s3 + $0x58] sm:$0xff]
    %v118 = vld [vmem:[%s3 + $0x60] sm:$0xff]
    %v119 = vld [vmem:[%s3 + $0x68] sm:$0xff]
    %v120 = vld [vmem:[%s3 + $0x70] sm:$0xff]
    %v121 = vld [vmem:[%s3 + $0x78] sm:$0xff]
    %v122 = vld [vmem:[%s4] sm:$0x1]
    %v124 = vlaneseq
    %v125 = vshrl.u32 %v124, 7
    %v126 = vsub.s32 0, %v125
    %v127 = vrot.slane %v122, %v126
    %129 = vmatprep.subr.mxu0 0.0
    %130 = vmatpush1.msra.mxu0 %v121
    %131 = vmatprep.subr.mxu0 0.0
    %132 = vmatpush1.msra.mxu0 %v120
    %133 = vmatprep.subr.mxu0 0.0
    %134 = vmatpush1.msra.mxu0 %v119
    %135 = vmatprep.subr.mxu0 0.0
    %136 = vmatpush1.msra.mxu0 %v118
    %137 = vmatprep.subr.mxu0 0.0
    %138 = vmatpush1.msra.mxu0 %v117
    %139 = vmatprep.subr.mxu0 0.0
    %140 = vmatpush1.msra.mxu0 %v116
    %141 = vmatprep.subr.mxu0 0.0
    %142 = vmatpush1.msra.mxu0 %v115
    %143 = vmatprep.subr.mxu0 0.0
    %144 = vmatpush1.msra.mxu0 %v114
    %145 = vmatprep.subr.mxu0 0.0
    %146 = vmatpush1.msra.mxu0 %v113
    %147 = vmatprep.subr.mxu0 0.0
    %148 = vmatpush1.msra.mxu0 %v112
    %149 = vmatprep.subr.mxu0 0.0
    %150 = vmatpush1.msra.mxu0 %v111
    %151 = vmatprep.subr.mxu0 0.0
    %152 = vmatpush1.msra.mxu0 %v110
    %153 = vmatprep.subr.mxu0 0.0
    %154 = vmatpush1.msra.mxu0 %v109
    %155 = vmatprep.subr.mxu0 0.0
    %156 = vmatpush1.msra.mxu0 %v108
    %157 = vmatprep.subr.mxu0 0.0
    %158 = vmatpush1.msra.mxu0 %v107
    %159 = vmatprep.subr.mxu0 0.0
    %160 = vmatpush1.msra.mxu0 %v106
    %161 = vmatprep.subr.mxu0 0.0
    %162 = vmatpush2.msra.mxu0 0.0
    %163 = vmatprep.subr.mxu0 0.0
    %164 = vmatpush2.msra.mxu0 0.0
    %165 = vmatprep.subr.mxu0 0.0
    %166 = vmatpush2.msra.mxu0 0.0
    %167 = vmatprep.subr.mxu0 0.0
    %168 = vmatpush2.msra.mxu0 0.0
    %169 = vmatprep.subr.mxu0 0.0
    %170 = vmatpush2.msra.mxu0 0.0
    %171 = vmatprep.subr.mxu0 0.0
    %172 = vmatpush2.msra.mxu0 0.0
    %173 = vmatprep.subr.mxu0 0.0
    %174 = vmatpush2.msra.mxu0 0.0
    %175 = vmatprep.subr.mxu0 0.0
    %176 = vmatpush2.msra.mxu0 0.0
    %177 = vmatprep.subr.mxu0 0.0
    %178 = vmatpush2.msra.mxu0 0.0
    %179 = vmatprep.subr.mxu0 0.0
    %180 = vmatpush2.msra.mxu0 0.0
    %181 = vmatprep.subr.mxu0 0.0
    %182 = vmatpush2.msra.mxu0 0.0
    %183 = vmatprep.subr.mxu0 0.0
    %184 = vmatpush2.msra.mxu0 0.0
    %185 = vmatprep.subr.mxu0 0.0
    %186 = vmatpush2.msra.mxu0 0.0
    %187 = vmatprep.subr.mxu0 0.0
    %188 = vmatpush2.msra.mxu0 0.0
    %189 = vmatprep.subr.mxu0 0.0
    %190 = vmatpush2.msra.mxu0 0.0
    %191 = vmatprep.subr.mxu0 0.0
    %192 = vmatpush2.msra.mxu0 0.0
    %193 = vmatprep.mubr.f32.mxu0 0.0
    %194 = vmatmul.mubr.f32.gmra.mxu0 %v105
    %v195 = vpop.f32.mrf.mxu0
    %v196 = vadd.f32 %v127, %v195
    %v197 = vpop.f32.mrf.mxu0
    %198 = vdwg.mxu0
    %vm199 = vcmask 60416
    %200 = vst.msk [vmem:[#allocation2] sm:$0xf] %vm199, %v196
    // Predicated region
    $region22: #{tpu_custom_call.1} parent=1 // pred_check
      _
    $region23: #{tpu_custom_call.1} parent=1 // pred_check_branch
      %202 = sbr.rel (0) target = $region25
    $region24: #{tpu_custom_call.1} parent=1 // pred_region
      %s204 = ssub.s32 64, 64
      %205 = vsyncadd [#allocation3], %s204
      %s207 = sshll.u32 [#allocation2], 4
      %s208 = int_to_ptr.vmem [resolvable:$true] %s207
      %210 = dma.vmem_to_hbm [thread:$0]  %s208, 64, %s5, [#allocation3]
    $region25: #{tpu_custom_call.1} parent=1 // pred_fallthru
      _
    // Predicated region
    $region26: #{tpu_custom_call.1} parent=1 // pred_check
      _
    $region27: #{tpu_custom_call.1} parent=1 // pred_check_branch
      %212 = sbr.rel (0) target = $region29
    $region28: #{tpu_custom_call.1} parent=1 // pred_region
      %213 = dma.done [#allocation3], 64
    $region29: #{tpu_custom_call.1} parent=1 // pred_fallthru
      _
    %214 = vsyncpa [#allocation3], 1

// kernel: tpu_custom_call.1
$region0: #{tpu_custom_call.1}
  #allocation0 [shape = 'u32[]', space=smem, size = 0x4, offset = 0x4, fixed_abs, tag = 'smem constant byte address 0x4 - core index']
  #allocation1 [shape = 'u32[144,128]{1,0:T(1,128)}', space=vmem, size = 0x12000, scoped, tag = 'internal scratch']
  %s0 = inlined_call_operand.vmem [shape: f32[4,16], index: 0, kind: input, shape index: {}]
  %s1 = inlined_call_operand.vmem [shape: f32[16,128], index: 1, kind: input, shape index: {}]
  %s2 = inlined_call_operand.vmem [shape: f32[1,128], index: 2, kind: input, shape index: {}]
  %s3 = inlined_call_operand.vmem [shape: f32[128,8], index: 3, kind: input, shape index: {}]
  %s4 = inlined_call_operand.vmem [shape: f32[1,8], index: 4, kind: input, shape index: {}]
  %s5 = inlined_call_operand.hbm [shape: f32[4,8], index: 5, kind: output, shape index: {}]
  %s6 = sld [smem:[#allocation0]]
  $region30: #{tpu_custom_call.1} parent=0
    _
  %s8 = ssub.s32 1, %s6
  %s9 = scalar_select 0, %s8, %s6
  $region1: #{tpu_custom_call.1} parent=0
    #allocation2 [shape = 'u8[2048]{0}', space=vmem, size = 0x800, scoped, tag = 'output window, operand 0, single buffered']
    #allocation3 [shape = 's32[1]{0}', space=sflag, size = 0x4, scoped, tag = 'scoped memory for tpu_custom_call.1']
    %10 = vsyncpa [#allocation3], 0
    // Predicated region
    $region2: #{tpu_custom_call.1} parent=1 // pred_check
      _
    $region3: #{tpu_custom_call.1} parent=1 // pred_check_branch
      %12 = sbr.rel (0) target = $region5
    $region4: #{tpu_custom_call.1} parent=1 // pred_region
      _
    $region5: #{tpu_custom_call.1} parent=1 // pred_fallthru
      _
    // Predicated region
    $region6: #{tpu_custom_call.1} parent=1 // pred_check
      _
    $region7: #{tpu_custom_call.1} parent=1 // pred_check_branch
      %14 = sbr.rel (0) target = $region9
    $region8: #{tpu_custom_call.1} parent=1 // pred_region
      _
    $region9: #{tpu_custom_call.1} parent=1 // pred_fallthru
      _
    // Predicated region
    $region10: #{tpu_custom_call.1} parent=1 // pred_check
      _
    $region11: #{tpu_custom_call.1} parent=1 // pred_check_branch
      %16 = sbr.rel (0) target = $region13
    $region12: #{tpu_custom_call.1} parent=1 // pred_region
      _
    $region13: #{tpu_custom_call.1} parent=1 // pred_fallthru
      _
    // Predicated region
    $region14: #{tpu_custom_call.1} parent=1 // pred_check
      _
    $region15: #{tpu_custom_call.1} parent=1 // pred_check_branch
      %18 = sbr.rel (0) target = $region17
    $region16: #{tpu_custom_call.1} parent=1 // pred_region
      _
    $region17: #{tpu_custom_call.1} parent=1 // pred_fallthru
      _
    // Predicated region
    $region18: #{tpu_custom_call.1} parent=1 // pred_check
      _
    $region19: #{tpu_custom_call.1} parent=1 // pred_check_branch
      %20 = sbr.rel (0) target = $region21
    $region20: #{tpu_custom_call.1} parent=1 // pred_region
      _
    $region21: #{tpu_custom_call.1} parent=1 // pred_fallthru
      _
    %v21 = vld [vmem:[%s0] sm:$0xf]
    %v22 = vld [vmem:[%s1] sm:$0xff]
    %v23 = vld [vmem:[%s1 + $0x8] sm:$0xff]
    %v24 = vld [vmem:[%s2] sm:$0x1]
    %v26 = vlaneseq
    %v27 = vshrl.u32 %v26, 7
    %v28 = vsub.s32 0, %v27
    %v29 = vrot.slane %v24, %v28
    %vm31 = vcmask 130048
    %v33 = vsel %vm31, %v21, 0
    %35 = vmatprep.subr.mxu0 0.0
    %36 = vmatpush1.msra.mxu0 0.0
    %37 = vmatprep.subr.mxu0 0.0
    %38 = vmatpush1.msra.mxu0 0.0
    %39 = vmatprep.subr.mxu0 0.0
    %40 = vmatpush1.msra.mxu0 0.0
    %41 = vmatprep.subr.mxu0 0.0
    %42 = vmatpush1.msra.mxu0 0.0
    %43 = vmatprep.subr.mxu0 0.0
    %44 = vmatpush1.msra.mxu0 0.0
    %45 = vmatprep.subr.mxu0 0.0
    %46 = vmatpush1.msra.mxu0 0.0
    %47 = vmatprep.subr.mxu0 0.0
    %48 = vmatpush1.msra.mxu0 0.0
    %49 = vmatprep.subr.mxu0 0.0
    %50 = vmatpush1.msra.mxu0 0.0
    %51 = vmatprep.subr.mxu0 0.0
    %52 = vmatpush1.msra.mxu0 0.0
    %53 = vmatprep.subr.mxu0 0.0
    %54 = vmatpush1.msra.mxu0 0.0
    %55 = vmatprep.subr.mxu0 0.0
    %56 = vmatpush1.msra.mxu0 0.0
    %57 = vmatprep.subr.mxu0 0.0
    %58 = vmatpush1.msra.mxu0 0.0
    %59 = vmatprep.subr.mxu0 0.0
    %60 = vmatpush1.msra.mxu0 0.0
    %61 = vmatprep.subr.mxu0 0.0
    %62 = vmatpush1.msra.mxu0 0.0
    %63 = vmatprep.subr.mxu0 0.0
    %64 = vmatpush1.msra.mxu0 %v23
    %65 = vmatprep.subr.mxu0 0.0
    %66 = vmatpush1.msra.mxu0 %v22
    %67 = vmatprep.subr.mxu0 0.0
    %68 = vmatpush2.msra.mxu0 0.0
    %69 = vmatprep.subr.mxu0 0.0
    %70 = vmatpush2.msra.mxu0 0.0
    %71 = vmatprep.subr.mxu0 0.0
    %72 = vmatpush2.msra.mxu0 0.0
    %73 = vmatprep.subr.mxu0 0.0
    %74 = vmatpush2.msra.mxu0 0.0
    %75 = vmatprep.subr.mxu0 0.0
    %76 = vmatpush2.msra.mxu0 0.0
    %77 = vmatprep.subr.mxu0 0.0
    %78 = vmatpush2.msra.mxu0 0.0
    %79 = vmatprep.subr.mxu0 0.0
    %80 = vmatpush2.msra.mxu0 0.0
    %81 = vmatprep.subr.mxu0 0.0
    %82 = vmatpush2.msra.mxu0 0.0
    %83 = vmatprep.subr.mxu0 0.0
    %84 = vmatpush2.msra.mxu0 0.0
    %85 = vmatprep.subr.mxu0 0.0
    %86 = vmatpush2.msra.mxu0 0.0
    %87 = vmatprep.subr.mxu0 0.0
    %88 = vmatpush2.msra.mxu0 0.0
    %89 = vmatprep.subr.mxu0 0.0
    %90 = vmatpush2.msra.mxu0 0.0
    %91 = vmatprep.subr.mxu0 0.0
    %92 = vmatpush2.msra.mxu0 0.0
    %93 = vmatprep.subr.mxu0 0.0
    %94 = vmatpush2.msra.mxu0 0.0
    %95 = vmatprep.subr.mxu0 0.0
    %96 = vmatpush2.msra.mxu0 0.0
    %97 = vmatprep.subr.mxu0 0.0
    %98 = vmatpush2.msra.mxu0 0.0
    %99 = vmatprep.mubr.f32.mxu0 0.0
    %100 = vmatmul.mubr.f32.gmra.mxu0 %v33
    %v101 = vpop.f32.mrf.mxu0
    %v102 = vadd.f32 %v29, %v101
    %v103 = vpop.f32.mrf.mxu0
    %104 = vdwg.mxu0
    %v105 = vmax.f32 %v102, 0.0
    %v106 = vld [vmem:[%s3] sm:$0xff]
    %v107 = vld [vmem:[%s3 + $0x8] sm:$0xff]
    %v108 = vld [vmem:[%s3 + $0x10] sm:$0xff]
    %v109 = vld [vmem:[%s3 + $0x18] sm:$0xff]
    %v110 = vld [vmem:[%s3 + $0x20] sm:$0xff]
    %v111 = vld [vmem:[%s3 + $0x28] sm:$0xff]
    %v112 = vld [vmem:[%s3 + $0x30] sm:$0xff]
    %v113 = vld [vmem:[%s3 + $0x38] sm:$0xff]
    %v114 = vld [vmem:[%s3 + $0x40] sm:$0xff]
    %v115 = vld [vmem:[%s3 + $0x48] sm:$0xff]
    %v116 = vld [vmem:[%s3 + $0x50] sm:$0xff]
    %v117 = vld [vmem:[%s3 + $0x58] sm:$0xff]
    %v118 = vld [vmem:[%s3 + $0x60] sm:$0xff]
    %v119 = vld [vmem:[%s3 + $0x68] sm:$0xff]
    %v120 = vld [vmem:[%s3 + $0x70] sm:$0xff]
    %v121 = vld [vmem:[%s3 + $0x78] sm:$0xff]
    %v122 = vld [vmem:[%s4] sm:$0x1]
    %v124 = vlaneseq
    %v125 = vshrl.u32 %v124, 7
    %v126 = vsub.s32 0, %v125
    %v127 = vrot.slane %v122, %v126
    %129 = vmatprep.subr.mxu0 0.0
    %130 = vmatpush1.msra.mxu0 %v121
    %131 = vmatprep.subr.mxu0 0.0
    %132 = vmatpush1.msra.mxu0 %v120
    %133 = vmatprep.subr.mxu0 0.0
    %134 = vmatpush1.msra.mxu0 %v119
    %135 = vmatprep.subr.mxu0 0.0
    %136 = vmatpush1.msra.mxu0 %v118
    %137 = vmatprep.subr.mxu0 0.0
    %138 = vmatpush1.msra.mxu0 %v117
    %139 = vmatprep.subr.mxu0 0.0
    %140 = vmatpush1.msra.mxu0 %v116
    %141 = vmatprep.subr.mxu0 0.0
    %142 = vmatpush1.msra.mxu0 %v115
    %143 = vmatprep.subr.mxu0 0.0
    %144 = vmatpush1.msra.mxu0 %v114
    %145 = vmatprep.subr.mxu0 0.0
    %146 = vmatpush1.msra.mxu0 %v113
    %147 = vmatprep.subr.mxu0 0.0
    %148 = vmatpush1.msra.mxu0 %v112
    %149 = vmatprep.subr.mxu0 0.0
    %150 = vmatpush1.msra.mxu0 %v111
    %151 = vmatprep.subr.mxu0 0.0
    %152 = vmatpush1.msra.mxu0 %v110
    %153 = vmatprep.subr.mxu0 0.0
    %154 = vmatpush1.msra.mxu0 %v109
    %155 = vmatprep.subr.mxu0 0.0
    %156 = vmatpush1.msra.mxu0 %v108
    %157 = vmatprep.subr.mxu0 0.0
    %158 = vmatpush1.msra.mxu0 %v107
    %159 = vmatprep.subr.mxu0 0.0
    %160 = vmatpush1.msra.mxu0 %v106
    %161 = vmatprep.subr.mxu0 0.0
    %162 = vmatpush2.msra.mxu0 0.0
    %163 = vmatprep.subr.mxu0 0.0
    %164 = vmatpush2.msra.mxu0 0.0
    %165 = vmatprep.subr.mxu0 0.0
    %166 = vmatpush2.msra.mxu0 0.0
    %167 = vmatprep.subr.mxu0 0.0
    %168 = vmatpush2.msra.mxu0 0.0
    %169 = vmatprep.subr.mxu0 0.0
    %170 = vmatpush2.msra.mxu0 0.0
    %171 = vmatprep.subr.mxu0 0.0
    %172 = vmatpush2.msra.mxu0 0.0
    %173 = vmatprep.subr.mxu0 0.0
    %174 = vmatpush2.msra.mxu0 0.0
    %175 = vmatprep.subr.mxu0 0.0
    %176 = vmatpush2.msra.mxu0 0.0
    %177 = vmatprep.subr.mxu0 0.0
    %178 = vmatpush2.msra.mxu0 0.0
    %179 = vmatprep.subr.mxu0 0.0
    %180 = vmatpush2.msra.mxu0 0.0
    %181 = vmatprep.subr.mxu0 0.0
    %182 = vmatpush2.msra.mxu0 0.0
    %183 = vmatprep.subr.mxu0 0.0
    %184 = vmatpush2.msra.mxu0 0.0
    %185 = vmatprep.subr.mxu0 0.0
    %186 = vmatpush2.msra.mxu0 0.0
    %187 = vmatprep.subr.mxu0 0.0
    %188 = vmatpush2.msra.mxu0 0.0
    %189 = vmatprep.subr.mxu0 0.0
    %190 = vmatpush2.msra.mxu0 0.0
    %191 = vmatprep.subr.mxu0 0.0
    %192 = vmatpush2.msra.mxu0 0.0
    %193 = vmatprep.mubr.f32.mxu0 0.0
    %194 = vmatmul.mubr.f32.gmra.mxu0 %v105
    %v195 = vpop.f32.mrf.mxu0
    %v196 = vadd.f32 %v127, %v195
    %v197 = vpop.f32.mrf.mxu0
    %198 = vdwg.mxu0
    %vm199 = vcmask 60416
    %200 = vst.msk [vmem:[#allocation2] sm:$0xf] %vm199, %v196
    // Predicated region
    $region22: #{tpu_custom_call.1} parent=1 // pred_check
      _
    $region23: #{tpu_custom_call.1} parent=1 // pred_check_branch
      %202 = sbr.rel (0) target = $region25
    $region24: #{tpu_custom_call.1} parent=1 // pred_region
      %s204 = ssub.s32 64, 64
      %205 = vsyncadd [#allocation3], %s204
      %s207 = sshll.u32 [#allocation2], 4
      %s208 = int_to_ptr.vmem [resolvable:$true] %s207
      %210 = dma.vmem_to_hbm [thread:$0]  %s208, 64, %s5, [#allocation3]
    $region25: #{tpu_custom_call.1} parent=1 // pred_fallthru
      _
    // Predicated region
    $region26: #{tpu_custom_call.1} parent=1 // pred_check
      _
    $region27: #{tpu_custom_call.1} parent=1 // pred_check_branch
      %212 = sbr.rel (0) target = $region29
    $region28: #{tpu_custom_call.1} parent=1 // pred_region
      %213 = dma.done [#allocation3], 64
    $region29: #{tpu_custom_call.1} parent=1 // pred_fallthru
      _
    %214 = vsyncpa [#allocation3], 1

</llo_original>
